<compile_context>
chip_gen: v7x
topology: tpu7x:2x2x1
jax: 0.10.0
libtpu: 0.0.40
codegen_flags: <defaults>
</compile_context>

<pallas_src>
import jax
import jax.numpy as jnp
from jax.experimental import pallas as pl
from jax.experimental.pallas import tpu as pltpu

_LANE = 128
_SUBLANE = 8


def _round_up(n, m):
    return ((n + m - 1) // m) * m


def _round_down(n, m):
    return (n // m) * m


def _make_kernel(slab_out):
    def kernel(x_ref, w1_ref, b1_ref, w2_ref, b2_ref, w3_ref, b3_ref, o_ref):
        # fc1 + ReLU (f32 MXU accumulation; bias rows (1, n) broadcast over the tile).
        h = jnp.dot(x_ref[...], w1_ref[...], preferred_element_type=jnp.float32)
        h = jnp.maximum(h + b1_ref[...], 0.0)
        # fc2 + ReLU.
        h = jnp.dot(h, w2_ref[...], preferred_element_type=jnp.float32)
        h = jnp.maximum(h + b2_ref[...], 0.0)
        # fc3.
        y = jnp.dot(h, w3_ref[...], preferred_element_type=jnp.float32) + b3_ref[...]
        if slab_out:
            # (tb, out) -> (tb*out/128, 128): lane-dense store (unmasked vst, dense DMA).
            y = y.reshape(o_ref.shape)
        o_ref[...] = y.astype(o_ref.dtype)

    return kernel


def _pick_tb(batch, in_size, out_size, x_itemsize, block_batch, vmem_budget_bytes):
    """Largest batch tile keeping double-buffered tiles + resident weights in budget."""
    # VMEM-resident weights & biases (constant index_map), lane/sublane padded, f32.
    resident = 4 * (_round_up(in_size, _SUBLANE) * _LANE       # w1 (in, 64), lanes pad to 128
                    + 64 * _LANE                               # w2 (64, 32)
                    + 32 * _round_up(out_size, _LANE)          # w3 (32, out)
                    + 3 * _SUBLANE * _LANE)                    # biases
    # Bytes per batch row that scale with the tile: double-buffered x and out tiles
    # plus the f32 h1/h2/h3 temporaries.
    per_row = (2 * _round_up(in_size, _LANE) * x_itemsize
               + 2 * _round_up(out_size, _LANE) * 4
               + 3 * _LANE * 4)
    avail = max(vmem_budget_bytes - resident, 16 * per_row)
    tb = min(block_batch, avail // per_row, _round_up(batch, _SUBLANE))
    tb = _round_down(tb, 16) if tb >= 16 else _SUBLANE
    # v7x megacore: the "parallel" batch axis shards across the 2 TensorCores; make
    # sure there are at least 2 grid steps when the batch is big enough.
    if batch >= 32 and -(-batch // tb) < 2:
        tb = max(16, _round_down(_round_up(batch, 16) // 2, 16))
    return tb


def _forward(x2d, w1, b1r, w2, b2r, w3, b3r, *, tb, slab):
    batch, in_size = x2d.shape
    out_size = w3.shape[1]
    grid = (pl.cdiv(batch, tb),)

    in_specs = [
        pl.BlockSpec((tb, in_size), lambda i: (i, 0)),   # x: tiles over batch (auto double-buffered)
        pl.BlockSpec(w1.shape, lambda i: (0, 0)),        # weights/biases: VMEM-resident
        pl.BlockSpec(b1r.shape, lambda i: (0, 0)),
        pl.BlockSpec(w2.shape, lambda i: (0, 0)),
        pl.BlockSpec(b2r.shape, lambda i: (0, 0)),
        pl.BlockSpec(w3.shape, lambda i: (0, 0)),
        pl.BlockSpec(b3r.shape, lambda i: (0, 0)),
    ]

    if slab:
        rows_total = (batch * out_size) // _LANE
        rows_tile = (tb * out_size) // _LANE
        out_shape = jax.ShapeDtypeStruct((rows_total, _LANE), jnp.float32)
        out_spec = pl.BlockSpec((rows_tile, _LANE), lambda i: (i, 0))
    else:
        out_shape = jax.ShapeDtypeStruct((batch, out_size), jnp.float32)
        out_spec = pl.BlockSpec((tb, out_size), lambda i: (i, 0))

    flops = 2 * batch * (in_size * 64 + 64 * 32 + 32 * out_size)
    bytes_accessed = (x2d.size * x2d.dtype.itemsize
                      + batch * out_size * 4
                      + sum(a.size * a.dtype.itemsize
                            for a in (w1, b1r, w2, b2r, w3, b3r)))

    out = pl.pallas_call(
        _make_kernel(slab),
        out_shape=out_shape,
        grid_spec=pltpu.PrefetchScalarGridSpec(
            num_scalar_prefetch=0,
            grid=grid,
            in_specs=in_specs,
            out_specs=out_spec,
        ),
        compiler_params=pltpu.CompilerParams(
            dimension_semantics=("parallel",),      # shard batch tiles across TCs (v7x)
            vmem_limit_bytes=32 * 1024 * 1024,      # > v5e's 16 MiB scoped default, <= v7x budget
        ),
        cost_estimate=pl.CostEstimate(flops=flops, transcendentals=0,
                                      bytes_accessed=bytes_accessed),
    )(x2d, w1, b1r, w2, b2r, w3, b3r)

    if slab:
        out = out.reshape(batch, out_size)          # contiguous row-major re-view (no copy)
    return out


def mlp_for_pca(x, params, *, block_batch=1024, lane_dense_out=True,
                vmem_budget_bytes=20 * 1024 * 1024):
    """x: (batch, *) -> flattened to (batch, input_size). Returns (batch, output_size) f32."""
    w1, b1, w2, b2, w3, b3 = params
    batch = x.shape[0]
    x2d = x.reshape(batch, -1)                       # torch.flatten(x, 1): free re-view
    in_size = x2d.shape[1]
    out_size = w3.shape[1]
    assert w1.shape == (in_size, 64)
    assert w2.shape == (64, 32)
    assert w3.shape[0] == 32

    # Biases as (1, n) rows so they broadcast over the batch tile (tiny).
    b1r, b2r, b3r = (b.reshape(1, -1) for b in (b1, b2, b3))

    tb = _pick_tb(batch, in_size, out_size, x2d.dtype.itemsize,
                  block_batch, vmem_budget_bytes)

    rows_tile = (tb * out_size) // _LANE
    slab_ok = (
        lane_dense_out
        and (tb * out_size) % _LANE == 0
        and batch % tb == 0
        and (rows_tile % _SUBLANE == 0 or rows_tile == (batch * out_size) // _LANE)
    )
    if slab_ok:
        try:
            return _forward(x2d, w1, b1r, w2, b2r, w3, b3r, tb=tb, slab=True)
        except Exception:
            # Mosaic on this jaxlib rejected the in-kernel (tb,out)->(tb*out/128,128)
            # relayout reshape; fall back to the straightforward narrow-lane output.
            pass
    return _forward(x2d, w1, b1r, w2, b2r, w3, b3r, tb=tb, slab=False)


def init_params(key, input_size, output_size):
    """Deterministic init mirroring nn.Linear (weights stored transposed: (in, out))."""
    ks = jax.random.split(key, 6)

    def linear(kw, kb, fan_in, fan_out):
        bound = 1.0 / jnp.sqrt(fan_in)
        w = jax.random.uniform(kw, (fan_in, fan_out), jnp.float32, -bound, bound)
        b = jax.random.uniform(kb, (fan_out,), jnp.float32, -bound, bound)
        return w, b

    w1, b1 = linear(ks[0], ks[1], input_size, 64)
    w2, b2 = linear(ks[2], ks[3], 64, 32)
    w3, b3 = linear(ks[4], ks[5], 32, output_size)
    return (w1, b1, w2, b2, w3, b3)


def _reference(x, params):
    """True f32 reference (HIGHEST precision), matching the PyTorch forward."""
    w1, b1, w2, b2, w3, b3 = params
    hp = jax.lax.Precision.HIGHEST
    h = x.reshape(x.shape[0], -1)
    h = jnp.maximum(jnp.dot(h, w1, precision=hp) + b1, 0.0)
    h = jnp.maximum(jnp.dot(h, w2, precision=hp) + b2, 0.0)
    return jnp.dot(h, w3, precision=hp) + b3


if __name__ == "__main__":
    key = jax.random.PRNGKey(0)
    k_x, k_p = jax.random.split(key)

    # Small shapes: batch=8, input feature map (4, 4, 4) flattens to input_size=64.
    batch = 8
    input_shape = (4, 4, 4)
    input_size = 4 * 4 * 4
    output_size = 16

    x = jax.random.normal(k_x, (batch,) + input_shape, dtype=jnp.float32)
    params = init_params(k_p, input_size, output_size)

    out = mlp_for_pca(x, params)
    out = jax.block_until_ready(out)

    ref = _reference(x, params)
    assert out.shape == (batch, output_size)
    assert jnp.allclose(out, ref, atol=2e-2, rtol=2e-2), "mismatch vs f32 reference"

    print("KERNEL_OK")
</pallas_src>

<mosaic_0001>
module attributes {stable_mosaic.version = 11 : i64} {
  func.func @kernel(%arg0: i32, %arg1: memref<8x64xf32, #tpu.memory_space<vmem>>, %arg2: memref<64x64xf32, #tpu.memory_space<vmem>>, %arg3: memref<1x64xf32, #tpu.memory_space<vmem>>, %arg4: memref<64x32xf32, #tpu.memory_space<vmem>>, %arg5: memref<1x32xf32, #tpu.memory_space<vmem>>, %arg6: memref<32x16xf32, #tpu.memory_space<vmem>>, %arg7: memref<1x16xf32, #tpu.memory_space<vmem>>, %arg8: memref<1x128xf32, #tpu.memory_space<vmem>>) attributes {dimension_semantics = [#tpu.dimension_semantics<parallel>], iteration_bounds = array<i64: 1>, scalar_prefetch = 0 : i64, scratch_operands = 0 : i64, tpu.core_type = #tpu.core_type<tc>, window_params = [{transform_indices = @transform_0, window_bounds = array<i64: 8, 64>}, {pipeline_mode = #tpu.pipeline_mode<synchronous>, transform_indices = @transform_1, window_bounds = array<i64: 64, 64>}, {pipeline_mode = #tpu.pipeline_mode<synchronous>, transform_indices = @transform_2, window_bounds = array<i64: 1, 64>}, {pipeline_mode = #tpu.pipeline_mode<synchronous>, transform_indices = @transform_3, window_bounds = array<i64: 64, 32>}, {pipeline_mode = #tpu.pipeline_mode<synchronous>, transform_indices = @transform_4, window_bounds = array<i64: 1, 32>}, {pipeline_mode = #tpu.pipeline_mode<synchronous>, transform_indices = @transform_5, window_bounds = array<i64: 32, 16>}, {pipeline_mode = #tpu.pipeline_mode<synchronous>, transform_indices = @transform_6, window_bounds = array<i64: 1, 16>}, {transform_indices = @transform_7, window_bounds = array<i64: 1, 128>}]} {
    %c0 = arith.constant 0 : index
    %c0_0 = arith.constant 0 : index
    %0 = vector.load %arg1[%c0, %c0_0] : memref<8x64xf32, #tpu.memory_space<vmem>>, vector<8x64xf32>
    %c0_1 = arith.constant 0 : index
    %c0_2 = arith.constant 0 : index
    %1 = vector.load %arg2[%c0_1, %c0_2] : memref<64x64xf32, #tpu.memory_space<vmem>>, vector<64x64xf32>
    %cst = arith.constant dense<0.000000e+00> : vector<8x64xf32>
    %2 = tpu.matmul %0, %1, %cst {dimension_numbers = #tpu.dot_dimension_numbers<[1], [0], [0], [1], [0, 0, 1, 1], [], []>} : vector<8x64xf32>, vector<64x64xf32>, vector<8x64xf32> -> vector<8x64xf32>
    %c0_3 = arith.constant 0 : index
    %c0_4 = arith.constant 0 : index
    %3 = vector.load %arg3[%c0_3, %c0_4] : memref<1x64xf32, #tpu.memory_space<vmem>>, vector<1x64xf32>
    %4 = vector.broadcast %3 : vector<1x64xf32> to vector<8x64xf32>
    %5 = arith.addf %2, %4 : vector<8x64xf32>
    %cst_5 = arith.constant 0.000000e+00 : f32
    %6 = vector.broadcast %cst_5 : f32 to vector<8x64xf32>
    %7 = arith.maximumf %5, %6 : vector<8x64xf32>
    %c0_6 = arith.constant 0 : index
    %c0_7 = arith.constant 0 : index
    %8 = vector.load %arg4[%c0_6, %c0_7] : memref<64x32xf32, #tpu.memory_space<vmem>>, vector<64x32xf32>
    %cst_8 = arith.constant dense<0.000000e+00> : vector<8x32xf32>
    %9 = tpu.matmul %7, %8, %cst_8 {dimension_numbers = #tpu.dot_dimension_numbers<[1], [0], [0], [1], [0, 0, 1, 1], [], []>} : vector<8x64xf32>, vector<64x32xf32>, vector<8x32xf32> -> vector<8x32xf32>
    %c0_9 = arith.constant 0 : index
    %c0_10 = arith.constant 0 : index
    %10 = vector.load %arg5[%c0_9, %c0_10] : memref<1x32xf32, #tpu.memory_space<vmem>>, vector<1x32xf32>
    %11 = vector.broadcast %10 : vector<1x32xf32> to vector<8x32xf32>
    %12 = arith.addf %9, %11 : vector<8x32xf32>
    %cst_11 = arith.constant 0.000000e+00 : f32
    %13 = vector.broadcast %cst_11 : f32 to vector<8x32xf32>
    %14 = arith.maximumf %12, %13 : vector<8x32xf32>
    %c0_12 = arith.constant 0 : index
    %c0_13 = arith.constant 0 : index
    %15 = vector.load %arg6[%c0_12, %c0_13] : memref<32x16xf32, #tpu.memory_space<vmem>>, vector<32x16xf32>
    %cst_14 = arith.constant dense<0.000000e+00> : vector<8x16xf32>
    %16 = tpu.matmul %14, %15, %cst_14 {dimension_numbers = #tpu.dot_dimension_numbers<[1], [0], [0], [1], [0, 0, 1, 1], [], []>} : vector<8x32xf32>, vector<32x16xf32>, vector<8x16xf32> -> vector<8x16xf32>
    %c0_15 = arith.constant 0 : index
    %c0_16 = arith.constant 0 : index
    %17 = vector.load %arg7[%c0_15, %c0_16] : memref<1x16xf32, #tpu.memory_space<vmem>>, vector<1x16xf32>
    %18 = vector.broadcast %17 : vector<1x16xf32> to vector<8x16xf32>
    %19 = arith.addf %16, %18 : vector<8x16xf32>
    %20 = vector.shape_cast %19 : vector<8x16xf32> to vector<1x128xf32>
    %c0_17 = arith.constant 0 : index
    %c0_18 = arith.constant 0 : index
    %21 = vector.load %arg8[%c0_17, %c0_18] : memref<1x128xf32, #tpu.memory_space<vmem>>, vector<1x128xf32>
    tpu.vector_store %arg8[%c0_17, %c0_18], %20 {strides = array<i32>} : memref<1x128xf32, #tpu.memory_space<vmem>>, vector<1x128xf32>,
    return
  }
  func.func @transform_0(%arg0: i32) -> (i32, i32) {
    %c0_i32 = arith.constant 0 : i32
    %c0_i32_0 = arith.constant 0 : i32
    return %arg0, %c0_i32 : i32, i32
  }
  func.func @transform_1(%arg0: i32) -> (i32, i32) {
    %c0_i32 = arith.constant 0 : i32
    %c0_i32_0 = arith.constant 0 : i32
    %c0_i32_1 = arith.constant 0 : i32
    return %c0_i32, %c0_i32_0 : i32, i32
  }
  func.func @transform_2(%arg0: i32) -> (i32, i32) {
    %c0_i32 = arith.constant 0 : i32
    %c0_i32_0 = arith.constant 0 : i32
    %c0_i32_1 = arith.constant 0 : i32
    return %c0_i32, %c0_i32_0 : i32, i32
  }
  func.func @transform_3(%arg0: i32) -> (i32, i32) {
    %c0_i32 = arith.constant 0 : i32
    %c0_i32_0 = arith.constant 0 : i32
    %c0_i32_1 = arith.constant 0 : i32
    return %c0_i32, %c0_i32_0 : i32, i32
  }
  func.func @transform_4(%arg0: i32) -> (i32, i32) {
    %c0_i32 = arith.constant 0 : i32
    %c0_i32_0 = arith.constant 0 : i32
    %c0_i32_1 = arith.constant 0 : i32
    return %c0_i32, %c0_i32_0 : i32, i32
  }
  func.func @transform_5(%arg0: i32) -> (i32, i32) {
    %c0_i32 = arith.constant 0 : i32
    %c0_i32_0 = arith.constant 0 : i32
    %c0_i32_1 = arith.constant 0 : i32
    return %c0_i32, %c0_i32_0 : i32, i32
  }
  func.func @transform_6(%arg0: i32) -> (i32, i32) {
    %c0_i32 = arith.constant 0 : i32
    %c0_i32_0 = arith.constant 0 : i32
    %c0_i32_1 = arith.constant 0 : i32
    return %c0_i32, %c0_i32_0 : i32, i32
  }
  func.func @transform_7(%arg0: i32) -> (i32, i32) {
    %c0_i32 = arith.constant 0 : i32
    %c0_i32_0 = arith.constant 0 : i32
    return %arg0, %c0_i32 : i32, i32
  }
}

module attributes {stable_mosaic.version = 11 : i64} {
  func.func @kernel(%arg0: i32, %arg1: memref<8x64xf32, #tpu.memory_space<vmem>>, %arg2: memref<64x64xf32, #tpu.memory_space<vmem>>, %arg3: memref<1x64xf32, #tpu.memory_space<vmem>>, %arg4: memref<64x32xf32, #tpu.memory_space<vmem>>, %arg5: memref<1x32xf32, #tpu.memory_space<vmem>>, %arg6: memref<32x16xf32, #tpu.memory_space<vmem>>, %arg7: memref<1x16xf32, #tpu.memory_space<vmem>>, %arg8: memref<8x16xf32, #tpu.memory_space<vmem>>) attributes {dimension_semantics = [#tpu.dimension_semantics<parallel>], iteration_bounds = array<i64: 1>, scalar_prefetch = 0 : i64, scratch_operands = 0 : i64, tpu.core_type = #tpu.core_type<tc>, window_params = [{transform_indices = @transform_0, window_bounds = array<i64: 8, 64>}, {pipeline_mode = #tpu.pipeline_mode<synchronous>, transform_indices = @transform_1, window_bounds = array<i64: 64, 64>}, {pipeline_mode = #tpu.pipeline_mode<synchronous>, transform_indices = @transform_2, window_bounds = array<i64: 1, 64>}, {pipeline_mode = #tpu.pipeline_mode<synchronous>, transform_indices = @transform_3, window_bounds = array<i64: 64, 32>}, {pipeline_mode = #tpu.pipeline_mode<synchronous>, transform_indices = @transform_4, window_bounds = array<i64: 1, 32>}, {pipeline_mode = #tpu.pipeline_mode<synchronous>, transform_indices = @transform_5, window_bounds = array<i64: 32, 16>}, {pipeline_mode = #tpu.pipeline_mode<synchronous>, transform_indices = @transform_6, window_bounds = array<i64: 1, 16>}, {transform_indices = @transform_7, window_bounds = array<i64: 8, 16>}]} {
    %c0 = arith.constant 0 : index
    %c0_0 = arith.constant 0 : index
    %0 = vector.load %arg1[%c0, %c0_0] : memref<8x64xf32, #tpu.memory_space<vmem>>, vector<8x64xf32>
    %c0_1 = arith.constant 0 : index
    %c0_2 = arith.constant 0 : index
    %1 = vector.load %arg2[%c0_1, %c0_2] : memref<64x64xf32, #tpu.memory_space<vmem>>, vector<64x64xf32>
    %cst = arith.constant dense<0.000000e+00> : vector<8x64xf32>
    %2 = tpu.matmul %0, %1, %cst {dimension_numbers = #tpu.dot_dimension_numbers<[1], [0], [0], [1], [0, 0, 1, 1], [], []>} : vector<8x64xf32>, vector<64x64xf32>, vector<8x64xf32> -> vector<8x64xf32>
    %c0_3 = arith.constant 0 : index
    %c0_4 = arith.constant 0 : index
    %3 = vector.load %arg3[%c0_3, %c0_4] : memref<1x64xf32, #tpu.memory_space<vmem>>, vector<1x64xf32>
    %4 = vector.broadcast %3 : vector<1x64xf32> to vector<8x64xf32>
    %5 = arith.addf %2, %4 : vector<8x64xf32>
    %cst_5 = arith.constant 0.000000e+00 : f32
    %6 = vector.broadcast %cst_5 : f32 to vector<8x64xf32>
    %7 = arith.maximumf %5, %6 : vector<8x64xf32>
    %c0_6 = arith.constant 0 : index
    %c0_7 = arith.constant 0 : index
    %8 = vector.load %arg4[%c0_6, %c0_7] : memref<64x32xf32, #tpu.memory_space<vmem>>, vector<64x32xf32>
    %cst_8 = arith.constant dense<0.000000e+00> : vector<8x32xf32>
    %9 = tpu.matmul %7, %8, %cst_8 {dimension_numbers = #tpu.dot_dimension_numbers<[1], [0], [0], [1], [0, 0, 1, 1], [], []>} : vector<8x64xf32>, vector<64x32xf32>, vector<8x32xf32> -> vector<8x32xf32>
    %c0_9 = arith.constant 0 : index
    %c0_10 = arith.constant 0 : index
    %10 = vector.load %arg5[%c0_9, %c0_10] : memref<1x32xf32, #tpu.memory_space<vmem>>, vector<1x32xf32>
    %11 = vector.broadcast %10 : vector<1x32xf32> to vector<8x32xf32>
    %12 = arith.addf %9, %11 : vector<8x32xf32>
    %cst_11 = arith.constant 0.000000e+00 : f32
    %13 = vector.broadcast %cst_11 : f32 to vector<8x32xf32>
    %14 = arith.maximumf %12, %13 : vector<8x32xf32>
    %c0_12 = arith.constant 0 : index
    %c0_13 = arith.constant 0 : index
    %15 = vector.load %arg6[%c0_12, %c0_13] : memref<32x16xf32, #tpu.memory_space<vmem>>, vector<32x16xf32>
    %cst_14 = arith.constant dense<0.000000e+00> : vector<8x16xf32>
    %16 = tpu.matmul %14, %15, %cst_14 {dimension_numbers = #tpu.dot_dimension_numbers<[1], [0], [0], [1], [0, 0, 1, 1], [], []>} : vector<8x32xf32>, vector<32x16xf32>, vector<8x16xf32> -> vector<8x16xf32>
    %c0_15 = arith.constant 0 : index
    %c0_16 = arith.constant 0 : index
    %17 = vector.load %arg7[%c0_15, %c0_16] : memref<1x16xf32, #tpu.memory_space<vmem>>, vector<1x16xf32>
    %18 = vector.broadcast %17 : vector<1x16xf32> to vector<8x16xf32>
    %19 = arith.addf %16, %18 : vector<8x16xf32>
    %c0_17 = arith.constant 0 : index
    %c0_18 = arith.constant 0 : index
    %20 = vector.load %arg8[%c0_17, %c0_18] : memref<8x16xf32, #tpu.memory_space<vmem>>, vector<8x16xf32>
    tpu.vector_store %arg8[%c0_17, %c0_18], %19 {strides = array<i32>} : memref<8x16xf32, #tpu.memory_space<vmem>>, vector<8x16xf32>,
    return
  }
  func.func @transform_0(%arg0: i32) -> (i32, i32) {
    %c0_i32 = arith.constant 0 : i32
    %c0_i32_0 = arith.constant 0 : i32
    return %arg0, %c0_i32 : i32, i32
  }
  func.func @transform_1(%arg0: i32) -> (i32, i32) {
    %c0_i32 = arith.constant 0 : i32
    %c0_i32_0 = arith.constant 0 : i32
    %c0_i32_1 = arith.constant 0 : i32
    return %c0_i32, %c0_i32_0 : i32, i32
  }
  func.func @transform_2(%arg0: i32) -> (i32, i32) {
    %c0_i32 = arith.constant 0 : i32
    %c0_i32_0 = arith.constant 0 : i32
    %c0_i32_1 = arith.constant 0 : i32
    return %c0_i32, %c0_i32_0 : i32, i32
  }
  func.func @transform_3(%arg0: i32) -> (i32, i32) {
    %c0_i32 = arith.constant 0 : i32
    %c0_i32_0 = arith.constant 0 : i32
    %c0_i32_1 = arith.constant 0 : i32
    return %c0_i32, %c0_i32_0 : i32, i32
  }
  func.func @transform_4(%arg0: i32) -> (i32, i32) {
    %c0_i32 = arith.constant 0 : i32
    %c0_i32_0 = arith.constant 0 : i32
    %c0_i32_1 = arith.constant 0 : i32
    return %c0_i32, %c0_i32_0 : i32, i32
  }
  func.func @transform_5(%arg0: i32) -> (i32, i32) {
    %c0_i32 = arith.constant 0 : i32
    %c0_i32_0 = arith.constant 0 : i32
    %c0_i32_1 = arith.constant 0 : i32
    return %c0_i32, %c0_i32_0 : i32, i32
  }
  func.func @transform_6(%arg0: i32) -> (i32, i32) {
    %c0_i32 = arith.constant 0 : i32
    %c0_i32_0 = arith.constant 0 : i32
    %c0_i32_1 = arith.constant 0 : i32
    return %c0_i32, %c0_i32_0 : i32, i32
  }
  func.func @transform_7(%arg0: i32) -> (i32, i32) {
    %c0_i32 = arith.constant 0 : i32
    %c0_i32_0 = arith.constant 0 : i32
    return %arg0, %c0_i32 : i32, i32
  }
}

</mosaic_0001>

<llo_original>
// kernel: tpu_custom_call.1
$region0: #{tpu_custom_call.1}
  #allocation0 [shape = 'u32[]', space=smem, size = 0x4, offset = 0x4, fixed_abs, tag = 'smem constant byte address 0x4 - core index']
  #allocation1 [shape = 'u32[144,128]{1,0:T(1,128)}', space=vmem, size = 0x12000, scoped, tag = 'internal scratch']
  %s0 = inlined_call_operand.vmem [shape: f32[8,64], index: 0, kind: input, shape index: {}]
  %s1 = inlined_call_operand.vmem [shape: f32[64,64], index: 1, kind: input, shape index: {}]
  %s2 = inlined_call_operand.vmem [shape: f32[1,64], index: 2, kind: input, shape index: {}]
  %s3 = inlined_call_operand.vmem [shape: f32[64,32], index: 3, kind: input, shape index: {}]
  %s4 = inlined_call_operand.vmem [shape: f32[1,32], index: 4, kind: input, shape index: {}]
  %s5 = inlined_call_operand.vmem [shape: f32[32,16], index: 5, kind: input, shape index: {}]
  %s6 = inlined_call_operand.vmem [shape: f32[1,16], index: 6, kind: input, shape index: {}]
  %s7 = inlined_call_operand.hbm [shape: f32[8,16], index: 7, kind: output, shape index: {}]
  %s8 = sld [smem:[#allocation0]]
  $region38: #{tpu_custom_call.1} parent=0
    _
  %s10 = ssub.s32 1, %s8
  %s11 = scalar_select 0, %s10, %s8
  $region1: #{tpu_custom_call.1} parent=0
    #allocation2 [shape = 'u8[4096]{0}', space=vmem, size = 0x1000, scoped, tag = 'output window, operand 0, single buffered']
    #allocation3 [shape = 's32[1]{0}', space=sflag, size = 0x4, scoped, tag = 'scoped memory for tpu_custom_call.1']
    %12 = vsyncpa [#allocation3], 0
    // Predicated region
    $region2: #{tpu_custom_call.1} parent=1 // pred_check
      _
    $region3: #{tpu_custom_call.1} parent=1 // pred_check_branch
      %14 = sbr.rel (0) target = $region5
    $region4: #{tpu_custom_call.1} parent=1 // pred_region
      _
    $region5: #{tpu_custom_call.1} parent=1 // pred_fallthru
      _
    // Predicated region
    $region6: #{tpu_custom_call.1} parent=1 // pred_check
      _
    $region7: #{tpu_custom_call.1} parent=1 // pred_check_branch
      %16 = sbr.rel (0) target = $region9
    $region8: #{tpu_custom_call.1} parent=1 // pred_region
      _
    $region9: #{tpu_custom_call.1} parent=1 // pred_fallthru
      _
    // Predicated region
    $region10: #{tpu_custom_call.1} parent=1 // pred_check
      _
    $region11: #{tpu_custom_call.1} parent=1 // pred_check_branch
      %18 = sbr.rel (0) target = $region13
    $region12: #{tpu_custom_call.1} parent=1 // pred_region
      _
    $region13: #{tpu_custom_call.1} parent=1 // pred_fallthru
      _
    // Predicated region
    $region14: #{tpu_custom_call.1} parent=1 // pred_check
      _
    $region15: #{tpu_custom_call.1} parent=1 // pred_check_branch
      %20 = sbr.rel (0) target = $region17
    $region16: #{tpu_custom_call.1} parent=1 // pred_region
      _
    $region17: #{tpu_custom_call.1} parent=1 // pred_fallthru
      _
    // Predicated region
    $region18: #{tpu_custom_call.1} parent=1 // pred_check
      _
    $region19: #{tpu_custom_call.1} parent=1 // pred_check_branch
      %22 = sbr.rel (0) target = $region21
    $region20: #{tpu_custom_call.1} parent=1 // pred_region
      _
    $region21: #{tpu_custom_call.1} parent=1 // pred_fallthru
      _
    // Predicated region
    $region22: #{tpu_custom_call.1} parent=1 // pred_check
      _
    $region23: #{tpu_custom_call.1} parent=1 // pred_check_branch
      %24 = sbr.rel (0) target = $region25
    $region24: #{tpu_custom_call.1} parent=1 // pred_region
      _
    $region25: #{tpu_custom_call.1} parent=1 // pred_fallthru
      _
    // Predicated region
    $region26: #{tpu_custom_call.1} parent=1 // pred_check
      _
    $region27: #{tpu_custom_call.1} parent=1 // pred_check_branch
      %26 = sbr.rel (0) target = $region29
    $region28: #{tpu_custom_call.1} parent=1 // pred_region
      _
    $region29: #{tpu_custom_call.1} parent=1 // pred_fallthru
      _
    %v27 = vld [vmem:[%s0] sm:$0xff]
    %v28 = vld [vmem:[%s1] sm:$0xff]
    %v29 = vld [vmem:[%s1 + $0x8] sm:$0xff]
    %v30 = vld [vmem:[%s1 + $0x10] sm:$0xff]
    %v31 = vld [vmem:[%s1 + $0x18] sm:$0xff]
    %v32 = vld [vmem:[%s1 + $0x20] sm:$0xff]
    %v33 = vld [vmem:[%s1 + $0x28] sm:$0xff]
    %v34 = vld [vmem:[%s1 + $0x30] sm:$0xff]
    %v35 = vld [vmem:[%s1 + $0x38] sm:$0xff]
    %v36 = vld [vmem:[%s2] sm:$0x1]
    %v38 = vlaneseq
    %v39 = vshrl.u32 %v38, 7
    %v40 = vsub.s32 0, %v39
    %v41 = vrot.slane %v36, %v40
    %vm43 = vcmask 523264
    %v45 = vsel %vm43, %v27, 0
    %47 = vmatprep.subr.mxu0 0.0
    %48 = vmatpush1.msra.mxu0 %v28
    %49 = vmatprep.subr.mxu0 0.0
    %50 = vmatpush1.msra.mxu0 %v29
    %51 = vmatprep.subr.mxu0 0.0
    %52 = vmatpush1.msra.mxu0 %v30
    %53 = vmatprep.subr.mxu0 0.0
    %54 = vmatpush1.msra.mxu0 %v31
    %55 = vmatprep.subr.mxu0 0.0
    %56 = vmatpush1.msra.mxu0 %v32
    %57 = vmatprep.subr.mxu0 0.0
    %58 = vmatpush1.msra.mxu0 %v33
    %59 = vmatprep.subr.mxu0 0.0
    %60 = vmatpush1.msra.mxu0 %v34
    %61 = vmatprep.subr.mxu0 0.0
    %62 = vmatpush1.msra.mxu0 %v35
    %63 = vmatprep.subr.mxu0 0.0
    %64 = vmatpush1.msra.mxu0 0.0
    %65 = vmatprep.subr.mxu0 0.0
    %66 = vmatpush1.msra.mxu0 0.0
    %67 = vmatprep.subr.mxu0 0.0
    %68 = vmatpush1.msra.mxu0 0.0
    %69 = vmatprep.subr.mxu0 0.0
    %70 = vmatpush1.msra.mxu0 0.0
    %71 = vmatprep.subr.mxu0 0.0
    %72 = vmatpush1.msra.mxu0 0.0
    %73 = vmatprep.subr.mxu0 0.0
    %74 = vmatpush1.msra.mxu0 0.0
    %75 = vmatprep.subr.mxu0 0.0
    %76 = vmatpush1.msra.mxu0 0.0
    %77 = vmatprep.subr.mxu0 0.0
    %78 = vmatpush1.msra.mxu0 0.0
    %79 = vmatprep.subr.mxu0 0.0
    %80 = vmatpush1.msra.mxu0 0.0
    %81 = vmatprep.subr.mxu0 0.0
    %82 = vmatpush1.msra.mxu0 0.0
    %83 = vmatprep.subr.mxu0 0.0
    %84 = vmatpush1.msra.mxu0 0.0
    %85 = vmatprep.subr.mxu0 0.0
    %86 = vmatpush1.msra.mxu0 0.0
    %87 = vmatprep.subr.mxu0 0.0
    %88 = vmatpush1.msra.mxu0 0.0
    %89 = vmatprep.subr.mxu0 0.0
    %90 = vmatpush1.msra.mxu0 0.0
    %91 = vmatprep.subr.mxu0 0.0
    %92 = vmatpush1.msra.mxu0 0.0
    %93 = vmatprep.subr.mxu0 0.0
    %94 = vmatpush1.msra.mxu0 0.0
    %95 = vmatprep.subr.mxu0 0.0
    %96 = vmatpush1.msra.mxu0 0.0
    %97 = vmatprep.subr.mxu0 0.0
    %98 = vmatpush1.msra.mxu0 0.0
    %99 = vmatprep.subr.mxu0 0.0
    %100 = vmatpush1.msra.mxu0 0.0
    %101 = vmatprep.subr.mxu0 0.0
    %102 = vmatpush1.msra.mxu0 0.0
    %103 = vmatprep.subr.mxu0 0.0
    %104 = vmatpush1.msra.mxu0 0.0
    %105 = vmatprep.subr.mxu0 0.0
    %106 = vmatpush1.msra.mxu0 0.0
    %107 = vmatprep.subr.mxu0 0.0
    %108 = vmatpush1.msra.mxu0 0.0
    %109 = vmatprep.subr.mxu0 0.0
    %110 = vmatpush1.msra.mxu0 0.0
    %111 = vmatprep.mubr.f32.mxu0 0.0
    %112 = vmatmul.mubr.f32.gmra.mrb[0].mxu0 %v45
    %v113 = vpop.f32.mrb[0].mxu0
    %v114 = vadd.f32 %v41, %v113
    %v115 = vpop.f32.mrb[0].mxu0
    %116 = vdwg.mxu0
    %v117 = vmax.f32 %v114, 0.0
    %v118 = vld [vmem:[%s3] sm:$0xff]
    %v119 = vld [vmem:[%s3 + $0x8] sm:$0xff]
    %v120 = vld [vmem:[%s3 + $0x10] sm:$0xff]
    %v121 = vld [vmem:[%s3 + $0x18] sm:$0xff]
    %v122 = vld [vmem:[%s3 + $0x20] sm:$0xff]
    %v123 = vld [vmem:[%s3 + $0x28] sm:$0xff]
    %v124 = vld [vmem:[%s3 + $0x30] sm:$0xff]
    %v125 = vld [vmem:[%s3 + $0x38] sm:$0xff]
    %v126 = vld [vmem:[%s4] sm:$0x1]
    %v128 = vlaneseq
    %v129 = vshrl.u32 %v128, 7
    %v130 = vsub.s32 0, %v129
    %v131 = vrot.slane %v126, %v130
    %v134 = vsel %vm43, %v117, 0
    %136 = vmatprep.subr.mxu0 0.0
    %137 = vmatpush1.msra.mxu0 %v118
    %138 = vmatprep.subr.mxu0 0.0
    %139 = vmatpush1.msra.mxu0 %v119
    %140 = vmatprep.subr.mxu0 0.0
    %141 = vmatpush1.msra.mxu0 %v120
    %142 = vmatprep.subr.mxu0 0.0
    %143 = vmatpush1.msra.mxu0 %v121
    %144 = vmatprep.subr.mxu0 0.0
    %145 = vmatpush1.msra.mxu0 %v122
    %146 = vmatprep.subr.mxu0 0.0
    %147 = vmatpush1.msra.mxu0 %v123
    %148 = vmatprep.subr.mxu0 0.0
    %149 = vmatpush1.msra.mxu0 %v124
    %150 = vmatprep.subr.mxu0 0.0
    %151 = vmatpush1.msra.mxu0 %v125
    %152 = vmatprep.subr.mxu0 0.0
    %153 = vmatpush1.msra.mxu0 0.0
    %154 = vmatprep.subr.mxu0 0.0
    %155 = vmatpush1.msra.mxu0 0.0
    %156 = vmatprep.subr.mxu0 0.0
    %157 = vmatpush1.msra.mxu0 0.0
    %158 = vmatprep.subr.mxu0 0.0
    %159 = vmatpush1.msra.mxu0 0.0
    %160 = vmatprep.subr.mxu0 0.0
    %161 = vmatpush1.msra.mxu0 0.0
    %162 = vmatprep.subr.mxu0 0.0
    %163 = vmatpush1.msra.mxu0 0.0
    %164 = vmatprep.subr.mxu0 0.0
    %165 = vmatpush1.msra.mxu0 0.0
    %166 = vmatprep.subr.mxu0 0.0
    %167 = vmatpush1.msra.mxu0 0.0
    %168 = vmatprep.subr.mxu0 0.0
    %169 = vmatpush1.msra.mxu0 0.0
    %170 = vmatprep.subr.mxu0 0.0
    %171 = vmatpush1.msra.mxu0 0.0
    %172 = vmatprep.subr.mxu0 0.0
    %173 = vmatpush1.msra.mxu0 0.0
    %174 = vmatprep.subr.mxu0 0.0
    %175 = vmatpush1.msra.mxu0 0.0
    %176 = vmatprep.subr.mxu0 0.0
    %177 = vmatpush1.msra.mxu0 0.0
    %178 = vmatprep.subr.mxu0 0.0
    %179 = vmatpush1.msra.mxu0 0.0
    %180 = vmatprep.subr.mxu0 0.0
    %181 = vmatpush1.msra.mxu0 0.0
    %182 = vmatprep.subr.mxu0 0.0
    %183 = vmatpush1.msra.mxu0 0.0
    %184 = vmatprep.subr.mxu0 0.0
    %185 = vmatpush1.msra.mxu0 0.0
    %186 = vmatprep.subr.mxu0 0.0
    %187 = vmatpush1.msra.mxu0 0.0
    %188 = vmatprep.subr.mxu0 0.0
    %189 = vmatpush1.msra.mxu0 0.0
    %190 = vmatprep.subr.mxu0 0.0
    %191 = vmatpush1.msra.mxu0 0.0
    %192 = vmatprep.subr.mxu0 0.0
    %193 = vmatpush1.msra.mxu0 0.0
    %194 = vmatprep.subr.mxu0 0.0
    %195 = vmatpush1.msra.mxu0 0.0
    %196 = vmatprep.subr.mxu0 0.0
    %197 = vmatpush1.msra.mxu0 0.0
    %198 = vmatprep.subr.mxu0 0.0
    %199 = vmatpush1.msra.mxu0 0.0
    %200 = vmatprep.mubr.f32.mxu0 0.0
    %201 = vmatmul.mubr.f32.gmra.mrb[0].mxu0 %v134
    %v202 = vpop.f32.mrb[0].mxu0
    %v203 = vadd.f32 %v131, %v202
    %v204 = vpop.f32.mrb[0].mxu0
    %205 = vdwg.mxu0
    %v206 = vmax.f32 %v203, 0.0
    %v207 = vld [vmem:[%s5] sm:$0xff]
    %v208 = vld [vmem:[%s5 + $0x8] sm:$0xff]
    %v209 = vld [vmem:[%s5 + $0x10] sm:$0xff]
    %v210 = vld [vmem:[%s5 + $0x18] sm:$0xff]
    %v211 = vld [vmem:[%s6] sm:$0x1]
    %v213 = vlaneseq
    %v214 = vshrl.u32 %v213, 7
    %v215 = vsub.s32 0, %v214
    %v216 = vrot.slane %v211, %v215
    %vm218 = vcmask 261120
    %v220 = vsel %vm218, %v206, 0
    %222 = vmatprep.subr.mxu0 0.0
    %223 = vmatpush1.msra.mxu0 %v207
    %224 = vmatprep.subr.mxu0 0.0
    %225 = vmatpush1.msra.mxu0 %v208
    %226 = vmatprep.subr.mxu0 0.0
    %227 = vmatpush1.msra.mxu0 %v209
    %228 = vmatprep.subr.mxu0 0.0
    %229 = vmatpush1.msra.mxu0 %v210
    %230 = vmatprep.subr.mxu0 0.0
    %231 = vmatpush1.msra.mxu0 0.0
    %232 = vmatprep.subr.mxu0 0.0
    %233 = vmatpush1.msra.mxu0 0.0
    %234 = vmatprep.subr.mxu0 0.0
    %235 = vmatpush1.msra.mxu0 0.0
    %236 = vmatprep.subr.mxu0 0.0
    %237 = vmatpush1.msra.mxu0 0.0
    %238 = vmatprep.subr.mxu0 0.0
    %239 = vmatpush1.msra.mxu0 0.0
    %240 = vmatprep.subr.mxu0 0.0
    %241 = vmatpush1.msra.mxu0 0.0
    %242 = vmatprep.subr.mxu0 0.0
    %243 = vmatpush1.msra.mxu0 0.0
    %244 = vmatprep.subr.mxu0 0.0
    %245 = vmatpush1.msra.mxu0 0.0
    %246 = vmatprep.subr.mxu0 0.0
    %247 = vmatpush1.msra.mxu0 0.0
    %248 = vmatprep.subr.mxu0 0.0
    %249 = vmatpush1.msra.mxu0 0.0
    %250 = vmatprep.subr.mxu0 0.0
    %251 = vmatpush1.msra.mxu0 0.0
    %252 = vmatprep.subr.mxu0 0.0
    %253 = vmatpush1.msra.mxu0 0.0
    %254 = vmatprep.subr.mxu0 0.0
    %255 = vmatpush1.msra.mxu0 0.0
    %256 = vmatprep.subr.mxu0 0.0
    %257 = vmatpush1.msra.mxu0 0.0
    %258 = vmatprep.subr.mxu0 0.0
    %259 = vmatpush1.msra.mxu0 0.0
    %260 = vmatprep.subr.mxu0 0.0
    %261 = vmatpush1.msra.mxu0 0.0
    %262 = vmatprep.subr.mxu0 0.0
    %263 = vmatpush1.msra.mxu0 0.0
    %264 = vmatprep.subr.mxu0 0.0
    %265 = vmatpush1.msra.mxu0 0.0
    %266 = vmatprep.subr.mxu0 0.0
    %267 = vmatpush1.msra.mxu0 0.0
    %268 = vmatprep.subr.mxu0 0.0
    %269 = vmatpush1.msra.mxu0 0.0
    %270 = vmatprep.subr.mxu0 0.0
    %271 = vmatpush1.msra.mxu0 0.0
    %272 = vmatprep.subr.mxu0 0.0
    %273 = vmatpush1.msra.mxu0 0.0
    %274 = vmatprep.subr.mxu0 0.0
    %275 = vmatpush1.msra.mxu0 0.0
    %276 = vmatprep.subr.mxu0 0.0
    %277 = vmatpush1.msra.mxu0 0.0
    %278 = vmatprep.subr.mxu0 0.0
    %279 = vmatpush1.msra.mxu0 0.0
    %280 = vmatprep.subr.mxu0 0.0
    %281 = vmatpush1.msra.mxu0 0.0
    %282 = vmatprep.subr.mxu0 0.0
    %283 = vmatpush1.msra.mxu0 0.0
    %284 = vmatprep.subr.mxu0 0.0
    %285 = vmatpush1.msra.mxu0 0.0
    %286 = vmatprep.mubr.f32.mxu0 0.0
    %287 = vmatmul.mubr.f32.gmra.mrb[0].mxu0 %v220
    %v288 = vpop.f32.mrb[0].mxu0
    %v289 = vadd.f32 %v216, %v288
    %v290 = vpop.f32.mrb[0].mxu0
    %291 = vdwg.mxu0
    %vm292 = vcmask 130048
    %293 = vst.msk [vmem:[#allocation2] sm:$0xff] %vm292, %v289
    // Predicated region
    $region30: #{tpu_custom_call.1} parent=1 // pred_check
      _
    $region31: #{tpu_custom_call.1} parent=1 // pred_check_branch
      %295 = sbr.rel (0) target = $region33
    $region32: #{tpu_custom_call.1} parent=1 // pred_region
      %s297 = ssub.s32 128, 128
      %298 = vsyncadd [#allocation3], %s297
      %s300 = sshll.u32 [#allocation2], 4
      %s301 = int_to_ptr.vmem [resolvable:$true] %s300
      %303 = dma.vmem_to_hbm [thread:$0]  %s301, 128, %s7, [#allocation3]
    $region33: #{tpu_custom_call.1} parent=1 // pred_fallthru
      _
    // Predicated region
    $region34: #{tpu_custom_call.1} parent=1 // pred_check
      _
    $region35: #{tpu_custom_call.1} parent=1 // pred_check_branch
      %305 = sbr.rel (0) target = $region37
    $region36: #{tpu_custom_call.1} parent=1 // pred_region
      %306 = dma.done [#allocation3], 128
    $region37: #{tpu_custom_call.1} parent=1 // pred_fallthru
      _
    %307 = vsyncpa [#allocation3], 1

</llo_original>
